<compile_context>
chip_gen: v5e
topology: v5e:2x2
jax: 0.10.0
libtpu: 0.0.40
codegen_flags: <defaults>
</compile_context>

<pallas_src>
import jax
import jax.numpy as jnp
import numpy as np
from jax.experimental import pallas as pl
from jax.experimental.pallas import tpu as pltpu


def _gelu_erf(x):
    """Erf-based GELU matching torch.nn.GELU() default (A&S 7.1.26 erf approx).

    The divide is replaced with an approximate EUP reciprocal and sign() with a
    select, keeping the whole polynomial on VPU/EUP slots (no VALU divide).
    All arithmetic is float32 (v5e has no bf16 VPU/EUP path).
    """
    z = x * 0.7071067811865476
    az = jnp.abs(z)
    t = pl.reciprocal(1.0 + 0.3275911 * az, approx=True)
    poly = t * (0.254829592
                + t * (-0.284496736
                       + t * (1.421413741
                              + t * (-1.453152027
                                     + t * 1.061405429))))
    erf_abs = 1.0 - poly * jnp.exp(-az * az)
    erf = jnp.where(x >= 0, erf_abs, -erf_abs)
    return 0.5 * x * (1.0 + erf)


def _make_mlp_kernel(utt_per_tile, frames, compute_dtype):
    def kernel(x_ref, w1_ref, b1_ref, w2_ref, b2_ref, w3_ref, b3_ref,
               w4_ref, b4_ref, logits_ref, emb_ref):
        x = x_ref[...]                                   # (upt*T, D) compute_dtype

        # frame-level MLP: (Linear -> GELU -> Dropout) x 3
        # TODO(synk): nn.Dropout / MC-dropout (dropout_flag, m_mcdp_rate) is
        # identity here -- eval-mode semantics only.
        h = _gelu_erf(jnp.dot(x, w1_ref[...],
                              preferred_element_type=jnp.float32) + b1_ref[...])
        h = _gelu_erf(jnp.dot(h.astype(compute_dtype), w2_ref[...],
                              preferred_element_type=jnp.float32) + b2_ref[...])
        h = _gelu_erf(jnp.dot(h.astype(compute_dtype), w3_ref[...],
                              preferred_element_type=jnp.float32) + b3_ref[...])

        # utterance-level pooling: max over frames (torch.max(..., dim=1)[0]).
        # Tile rows are whole utterances so the max never crosses a tile;
        # frames == 8 keeps this reshape relayout-free (one sublane group per
        # utterance).
        h3 = h.reshape(utt_per_tile, frames, h.shape[-1])
        emb = jnp.max(h3, axis=1)                        # (upt, out_dim) f32

        # utterance-level classifier (tiny matmul, per tile).
        logits = jnp.dot(emb, w4_ref[...].astype(jnp.float32),
                         preferred_element_type=jnp.float32) + b4_ref[...]

        emb_ref[...] = emb.astype(emb_ref.dtype)
        logits_ref[...] = logits.astype(logits_ref.dtype)

    return kernel


def _choose_utt_per_tile(batch, frames, target_rows):
    """Utterances per grid step: whole utterances per tile and a multiple of 8
    (sublane-aligned output blocks); ~target_rows activation rows per tile."""
    upt = max(8, (target_rows // max(frames, 1)) // 8 * 8)
    if upt >= batch:
        return batch          # single tile: full-array blocks are always legal
    return upt


def mlp_forward(feat, params, *, compute_dtype=jnp.bfloat16, target_rows=512):
    """feat: (B, T, D_in) f32 -> (logits (B, num_classes) f32, emb (B, out_dim) f32)."""
    w1, b1, w2, b2, w3, b3, w4, b4 = params
    B, T, D = feat.shape
    h1, h2 = w1.shape[1], w2.shape[1]
    out_dim = w3.shape[1]
    num_classes = w4.shape[1]

    rows = B * T
    upt = _choose_utt_per_tile(B, T, target_rows)
    tile_rows = upt * T
    num_tiles = pl.cdiv(B, upt)

    # Activation stream + weights in compute dtype (bf16 halves HBM traffic and
    # feeds the MXU natively); biases / GELU / accumulation stay float32.
    x2 = feat.reshape(rows, D).astype(compute_dtype)
    w1c, w2c, w3c, w4c = (w.astype(compute_dtype) for w in (w1, w2, w3, w4))

    kernel = _make_mlp_kernel(upt, T, compute_dtype)

    def resident(shape):
        # Weights/biases: full-extent block, same block for every grid step.
        return pl.BlockSpec(shape, lambda i: (0, 0))

    in_specs = [
        pl.BlockSpec((tile_rows, D), lambda i: (i, 0)),   # activation rows (pipelined)
        resident(w1.shape), resident(b1.shape),
        resident(w2.shape), resident(b2.shape),
        resident(w3.shape), resident(b3.shape),
        resident(w4.shape), resident(b4.shape),
    ]
    out_specs = (pl.BlockSpec((upt, num_classes), lambda i: (i, 0)),
                 pl.BlockSpec((upt, out_dim), lambda i: (i, 0)))

    flops = 2 * rows * (D * h1 + h1 * h2 + h2 * out_dim) \
        + 2 * B * out_dim * num_classes
    transcendentals = 2 * rows * (h1 + h2 + out_dim)      # exp + recip per element
    bytes_accessed = int(
        x2.size * x2.dtype.itemsize
        + sum(int(np.prod(w.shape)) * np.dtype(compute_dtype).itemsize
              for w in (w1, w2, w3, w4))
        + sum(int(np.prod(b.shape)) * 4 for b in (b1, b2, b3, b4))
        + B * (num_classes + out_dim) * 4)

    logits, emb = pl.pallas_call(
        kernel,
        out_shape=(jax.ShapeDtypeStruct((B, num_classes), jnp.float32),
                   jax.ShapeDtypeStruct((B, out_dim), jnp.float32)),
        grid=(num_tiles,),
        in_specs=in_specs,
        out_specs=out_specs,
        compiler_params=pltpu.CompilerParams(
            # Row tiles are independent -> shard across both TCs on v7x.
            dimension_semantics=("parallel",)),
        cost_estimate=pl.CostEstimate(flops=flops,
                                      transcendentals=transcendentals,
                                      bytes_accessed=bytes_accessed),
    )(x2, w1c, b1, w2c, b2, w3c, b3, w4c, b4)
    return logits, emb


def init_params(key, input_dim, out_dim, num_classes, hidden_dim=(64, 64)):
    """Deterministic init mimicking torch.nn.Linear (uniform +/- 1/sqrt(fan_in))."""
    layer_dims = [(input_dim, hidden_dim[0]),
                  (hidden_dim[0], hidden_dim[1]),
                  (hidden_dim[1], out_dim),
                  (out_dim, num_classes)]
    params = []
    for fan_in, fan_out in layer_dims:
        key, kw, kb = jax.random.split(key, 3)
        bound = 1.0 / np.sqrt(fan_in)
        w = jax.random.uniform(kw, (fan_in, fan_out), jnp.float32, -bound, bound)
        b = jax.random.uniform(kb, (1, fan_out), jnp.float32, -bound, bound)
        params += [w, b]
    return params


def mlp_reference(feat, params):
    """Pure-JAX reference (eval-mode semantics of the PyTorch module)."""
    w1, b1, w2, b2, w3, b3, w4, b4 = params
    h = jax.nn.gelu(feat @ w1 + b1[0], approximate=False)
    h = jax.nn.gelu(h @ w2 + b2[0], approximate=False)
    h = jax.nn.gelu(h @ w3 + b3[0], approximate=False)
    emb = jnp.max(h, axis=1)
    logits = emb @ w4 + b4[0]
    return logits, emb


if __name__ == "__main__":
    # MLP(input_dim=32, out_dim=32, num_classes=2, hidden_dim=[64, 64])
    input_dim, out_dim, num_classes = 32, 32, 2
    key = jax.random.PRNGKey(0)
    key, kp = jax.random.split(key)
    params = init_params(kp, input_dim, out_dim, num_classes)

    # ---- small single-tile case (toy module shapes) -------------------------
    B, T = 2, 8
    key, kf = jax.random.split(key)
    feat = jax.random.normal(kf, (B, T, input_dim), jnp.float32)
    ref_logits, ref_emb = mlp_reference(feat, params)

    # primary (perf) path: bf16 operands, f32 accumulation / GELU
    logits, emb = jax.block_until_ready(
        mlp_forward(feat, params, compute_dtype=jnp.bfloat16))
    np.testing.assert_allclose(np.asarray(logits), np.asarray(ref_logits),
                               rtol=5e-2, atol=5e-2)
    np.testing.assert_allclose(np.asarray(emb), np.asarray(ref_emb),
                               rtol=5e-2, atol=5e-2)

    # f32 path for tighter numerical parity with the PyTorch module
    logits32, emb32 = jax.block_until_ready(
        mlp_forward(feat, params, compute_dtype=jnp.float32))
    np.testing.assert_allclose(np.asarray(logits32), np.asarray(ref_logits),
                               rtol=1e-2, atol=1e-2)
    np.testing.assert_allclose(np.asarray(emb32), np.asarray(ref_emb),
                               rtol=1e-2, atol=1e-2)

    # ---- gridded case: multiple row tiles, resident weights -----------------
    Bg, Tg = 24, 8
    key, kg = jax.random.split(key)
    featg = jax.random.normal(kg, (Bg, Tg, input_dim), jnp.float32)
    refg_logits, refg_emb = mlp_reference(featg, params)
    glogits, gemb = jax.block_until_ready(
        mlp_forward(featg, params, compute_dtype=jnp.bfloat16, target_rows=64))
    np.testing.assert_allclose(np.asarray(glogits), np.asarray(refg_logits),
                               rtol=5e-2, atol=5e-2)
    np.testing.assert_allclose(np.asarray(gemb), np.asarray(refg_emb),
                               rtol=5e-2, atol=5e-2)

    assert logits.shape == (B, num_classes) and emb.shape == (B, out_dim)
    assert glogits.shape == (Bg, num_classes) and gemb.shape == (Bg, out_dim)
    print("KERNEL_OK")
</pallas_src>

<mosaic_0001>
module attributes {stable_mosaic.version = 11 : i64} {
  func.func @kernel(%arg0: i32, %arg1: memref<16x32xbf16, #tpu.memory_space<vmem>>, %arg2: memref<32x64xbf16, #tpu.memory_space<vmem>>, %arg3: memref<1x64xf32, #tpu.memory_space<vmem>>, %arg4: memref<64x64xbf16, #tpu.memory_space<vmem>>, %arg5: memref<1x64xf32, #tpu.memory_space<vmem>>, %arg6: memref<64x32xbf16, #tpu.memory_space<vmem>>, %arg7: memref<1x32xf32, #tpu.memory_space<vmem>>, %arg8: memref<32x2xbf16, #tpu.memory_space<vmem>>, %arg9: memref<1x2xf32, #tpu.memory_space<vmem>>, %arg10: memref<2x2xf32, #tpu.memory_space<vmem>>, %arg11: memref<2x32xf32, #tpu.memory_space<vmem>>) attributes {dimension_semantics = [#tpu.dimension_semantics<parallel>], iteration_bounds = array<i64: 1>, scalar_prefetch = 0 : i64, scratch_operands = 0 : i64, tpu.core_type = #tpu.core_type<tc>, window_params = [{transform_indices = @transform_0, window_bounds = array<i64: 16, 32>}, {pipeline_mode = #tpu.pipeline_mode<synchronous>, transform_indices = @transform_1, window_bounds = array<i64: 32, 64>}, {pipeline_mode = #tpu.pipeline_mode<synchronous>, transform_indices = @transform_2, window_bounds = array<i64: 1, 64>}, {pipeline_mode = #tpu.pipeline_mode<synchronous>, transform_indices = @transform_3, window_bounds = array<i64: 64, 64>}, {pipeline_mode = #tpu.pipeline_mode<synchronous>, transform_indices = @transform_4, window_bounds = array<i64: 1, 64>}, {pipeline_mode = #tpu.pipeline_mode<synchronous>, transform_indices = @transform_5, window_bounds = array<i64: 64, 32>}, {pipeline_mode = #tpu.pipeline_mode<synchronous>, transform_indices = @transform_6, window_bounds = array<i64: 1, 32>}, {pipeline_mode = #tpu.pipeline_mode<synchronous>, transform_indices = @transform_7, window_bounds = array<i64: 32, 2>}, {pipeline_mode = #tpu.pipeline_mode<synchronous>, transform_indices = @transform_8, window_bounds = array<i64: 1, 2>}, {transform_indices = @transform_9, window_bounds = array<i64: 2, 2>}, {transform_indices = @transform_10, window_bounds = array<i64: 2, 32>}]} {
    %c0 = arith.constant 0 : index
    %c0_0 = arith.constant 0 : index
    %0 = vector.load %arg1[%c0, %c0_0] : memref<16x32xbf16, #tpu.memory_space<vmem>>, vector<16x32xbf16>
    %c0_1 = arith.constant 0 : index
    %c0_2 = arith.constant 0 : index
    %1 = vector.load %arg2[%c0_1, %c0_2] : memref<32x64xbf16, #tpu.memory_space<vmem>>, vector<32x64xbf16>
    %cst = arith.constant dense<0.000000e+00> : vector<16x64xf32>
    %2 = tpu.matmul %0, %1, %cst {dimension_numbers = #tpu.dot_dimension_numbers<[1], [0], [0], [1], [0, 0, 1, 1], [], []>} : vector<16x32xbf16>, vector<32x64xbf16>, vector<16x64xf32> -> vector<16x64xf32>
    %c0_3 = arith.constant 0 : index
    %c0_4 = arith.constant 0 : index
    %3 = vector.load %arg3[%c0_3, %c0_4] : memref<1x64xf32, #tpu.memory_space<vmem>>, vector<1x64xf32>
    %4 = vector.broadcast %3 : vector<1x64xf32> to vector<16x64xf32>
    %5 = arith.addf %2, %4 : vector<16x64xf32>
    %cst_5 = arith.constant 0.707106769 : f32
    %6 = vector.broadcast %cst_5 : f32 to vector<16x64xf32>
    %7 = arith.mulf %5, %6 : vector<16x64xf32>
    %8 = math.absf %7 : vector<16x64xf32>
    %cst_6 = arith.constant 0.327591091 : f32
    %9 = vector.broadcast %cst_6 : f32 to vector<16x64xf32>
    %10 = arith.mulf %9, %8 : vector<16x64xf32>
    %cst_7 = arith.constant 1.000000e+00 : f32
    %11 = vector.broadcast %cst_7 : f32 to vector<16x64xf32>
    %12 = arith.addf %11, %10 : vector<16x64xf32>
    %13 = tpu.reciprocal %12 {approx = true} : vector<16x64xf32> -> vector<16x64xf32>
    %cst_8 = arith.constant 1.06140542 : f32
    %14 = vector.broadcast %cst_8 : f32 to vector<16x64xf32>
    %15 = arith.mulf %13, %14 : vector<16x64xf32>
    %cst_9 = arith.constant -1.45315206 : f32
    %16 = vector.broadcast %cst_9 : f32 to vector<16x64xf32>
    %17 = arith.addf %16, %15 : vector<16x64xf32>
    %18 = arith.mulf %13, %17 : vector<16x64xf32>
    %cst_10 = arith.constant 1.42141378 : f32
    %19 = vector.broadcast %cst_10 : f32 to vector<16x64xf32>
    %20 = arith.addf %19, %18 : vector<16x64xf32>
    %21 = arith.mulf %13, %20 : vector<16x64xf32>
    %cst_11 = arith.constant -0.284496725 : f32
    %22 = vector.broadcast %cst_11 : f32 to vector<16x64xf32>
    %23 = arith.addf %22, %21 : vector<16x64xf32>
    %24 = arith.mulf %13, %23 : vector<16x64xf32>
    %cst_12 = arith.constant 0.254829586 : f32
    %25 = vector.broadcast %cst_12 : f32 to vector<16x64xf32>
    %26 = arith.addf %25, %24 : vector<16x64xf32>
    %27 = arith.mulf %13, %26 : vector<16x64xf32>
    %cst_13 = arith.constant 0.000000e+00 : f32
    %28 = vector.broadcast %cst_13 : f32 to vector<16x64xf32>
    %29 = arith.subf %28, %8 : vector<16x64xf32>
    %30 = arith.mulf %29, %8 : vector<16x64xf32>
    %31 = math.exp %30 : vector<16x64xf32>
    %32 = arith.mulf %27, %31 : vector<16x64xf32>
    %cst_14 = arith.constant 1.000000e+00 : f32
    %33 = vector.broadcast %cst_14 : f32 to vector<16x64xf32>
    %34 = arith.subf %33, %32 : vector<16x64xf32>
    %cst_15 = arith.constant 0.000000e+00 : f32
    %35 = vector.broadcast %cst_15 : f32 to vector<16x64xf32>
    %36 = arith.cmpf oge, %5, %35 : vector<16x64xf32>
    %cst_16 = arith.constant 0.000000e+00 : f32
    %37 = vector.broadcast %cst_16 : f32 to vector<16x64xf32>
    %38 = arith.subf %37, %34 : vector<16x64xf32>
    %39 = arith.select %36, %34, %38 : vector<16x64xi1>, vector<16x64xf32>
    %cst_17 = arith.constant 5.000000e-01 : f32
    %40 = vector.broadcast %cst_17 : f32 to vector<16x64xf32>
    %41 = arith.mulf %40, %5 : vector<16x64xf32>
    %cst_18 = arith.constant 1.000000e+00 : f32
    %42 = vector.broadcast %cst_18 : f32 to vector<16x64xf32>
    %43 = arith.addf %42, %39 : vector<16x64xf32>
    %44 = arith.mulf %41, %43 : vector<16x64xf32>
    %45 = arith.truncf %44 : vector<16x64xf32> to vector<16x64xbf16>
    %c0_19 = arith.constant 0 : index
    %c0_20 = arith.constant 0 : index
    %46 = vector.load %arg4[%c0_19, %c0_20] : memref<64x64xbf16, #tpu.memory_space<vmem>>, vector<64x64xbf16>
    %cst_21 = arith.constant dense<0.000000e+00> : vector<16x64xf32>
    %47 = tpu.matmul %45, %46, %cst_21 {dimension_numbers = #tpu.dot_dimension_numbers<[1], [0], [0], [1], [0, 0, 1, 1], [], []>} : vector<16x64xbf16>, vector<64x64xbf16>, vector<16x64xf32> -> vector<16x64xf32>
    %c0_22 = arith.constant 0 : index
    %c0_23 = arith.constant 0 : index
    %48 = vector.load %arg5[%c0_22, %c0_23] : memref<1x64xf32, #tpu.memory_space<vmem>>, vector<1x64xf32>
    %49 = vector.broadcast %48 : vector<1x64xf32> to vector<16x64xf32>
    %50 = arith.addf %47, %49 : vector<16x64xf32>
    %cst_24 = arith.constant 0.707106769 : f32
    %51 = vector.broadcast %cst_24 : f32 to vector<16x64xf32>
    %52 = arith.mulf %50, %51 : vector<16x64xf32>
    %53 = math.absf %52 : vector<16x64xf32>
    %cst_25 = arith.constant 0.327591091 : f32
    %54 = vector.broadcast %cst_25 : f32 to vector<16x64xf32>
    %55 = arith.mulf %54, %53 : vector<16x64xf32>
    %cst_26 = arith.constant 1.000000e+00 : f32
    %56 = vector.broadcast %cst_26 : f32 to vector<16x64xf32>
    %57 = arith.addf %56, %55 : vector<16x64xf32>
    %58 = tpu.reciprocal %57 {approx = true} : vector<16x64xf32> -> vector<16x64xf32>
    %cst_27 = arith.constant 1.06140542 : f32
    %59 = vector.broadcast %cst_27 : f32 to vector<16x64xf32>
    %60 = arith.mulf %58, %59 : vector<16x64xf32>
    %cst_28 = arith.constant -1.45315206 : f32
    %61 = vector.broadcast %cst_28 : f32 to vector<16x64xf32>
    %62 = arith.addf %61, %60 : vector<16x64xf32>
    %63 = arith.mulf %58, %62 : vector<16x64xf32>
    %cst_29 = arith.constant 1.42141378 : f32
    %64 = vector.broadcast %cst_29 : f32 to vector<16x64xf32>
    %65 = arith.addf %64, %63 : vector<16x64xf32>
    %66 = arith.mulf %58, %65 : vector<16x64xf32>
    %cst_30 = arith.constant -0.284496725 : f32
    %67 = vector.broadcast %cst_30 : f32 to vector<16x64xf32>
    %68 = arith.addf %67, %66 : vector<16x64xf32>
    %69 = arith.mulf %58, %68 : vector<16x64xf32>
    %cst_31 = arith.constant 0.254829586 : f32
    %70 = vector.broadcast %cst_31 : f32 to vector<16x64xf32>
    %71 = arith.addf %70, %69 : vector<16x64xf32>
    %72 = arith.mulf %58, %71 : vector<16x64xf32>
    %cst_32 = arith.constant 0.000000e+00 : f32
    %73 = vector.broadcast %cst_32 : f32 to vector<16x64xf32>
    %74 = arith.subf %73, %53 : vector<16x64xf32>
    %75 = arith.mulf %74, %53 : vector<16x64xf32>
    %76 = math.exp %75 : vector<16x64xf32>
    %77 = arith.mulf %72, %76 : vector<16x64xf32>
    %cst_33 = arith.constant 1.000000e+00 : f32
    %78 = vector.broadcast %cst_33 : f32 to vector<16x64xf32>
    %79 = arith.subf %78, %77 : vector<16x64xf32>
    %cst_34 = arith.constant 0.000000e+00 : f32
    %80 = vector.broadcast %cst_34 : f32 to vector<16x64xf32>
    %81 = arith.cmpf oge, %50, %80 : vector<16x64xf32>
    %cst_35 = arith.constant 0.000000e+00 : f32
    %82 = vector.broadcast %cst_35 : f32 to vector<16x64xf32>
    %83 = arith.subf %82, %79 : vector<16x64xf32>
    %84 = arith.select %81, %79, %83 : vector<16x64xi1>, vector<16x64xf32>
    %cst_36 = arith.constant 5.000000e-01 : f32
    %85 = vector.broadcast %cst_36 : f32 to vector<16x64xf32>
    %86 = arith.mulf %85, %50 : vector<16x64xf32>
    %cst_37 = arith.constant 1.000000e+00 : f32
    %87 = vector.broadcast %cst_37 : f32 to vector<16x64xf32>
    %88 = arith.addf %87, %84 : vector<16x64xf32>
    %89 = arith.mulf %86, %88 : vector<16x64xf32>
    %90 = arith.truncf %89 : vector<16x64xf32> to vector<16x64xbf16>
    %c0_38 = arith.constant 0 : index
    %c0_39 = arith.constant 0 : index
    %91 = vector.load %arg6[%c0_38, %c0_39] : memref<64x32xbf16, #tpu.memory_space<vmem>>, vector<64x32xbf16>
    %cst_40 = arith.constant dense<0.000000e+00> : vector<16x32xf32>
    %92 = tpu.matmul %90, %91, %cst_40 {dimension_numbers = #tpu.dot_dimension_numbers<[1], [0], [0], [1], [0, 0, 1, 1], [], []>} : vector<16x64xbf16>, vector<64x32xbf16>, vector<16x32xf32> -> vector<16x32xf32>
    %c0_41 = arith.constant 0 : index
    %c0_42 = arith.constant 0 : index
    %93 = vector.load %arg7[%c0_41, %c0_42] : memref<1x32xf32, #tpu.memory_space<vmem>>, vector<1x32xf32>
    %94 = vector.broadcast %93 : vector<1x32xf32> to vector<16x32xf32>
    %95 = arith.addf %92, %94 : vector<16x32xf32>
    %cst_43 = arith.constant 0.707106769 : f32
    %96 = vector.broadcast %cst_43 : f32 to vector<16x32xf32>
    %97 = arith.mulf %95, %96 : vector<16x32xf32>
    %98 = math.absf %97 : vector<16x32xf32>
    %cst_44 = arith.constant 0.327591091 : f32
    %99 = vector.broadcast %cst_44 : f32 to vector<16x32xf32>
    %100 = arith.mulf %99, %98 : vector<16x32xf32>
    %cst_45 = arith.constant 1.000000e+00 : f32
    %101 = vector.broadcast %cst_45 : f32 to vector<16x32xf32>
    %102 = arith.addf %101, %100 : vector<16x32xf32>
    %103 = tpu.reciprocal %102 {approx = true} : vector<16x32xf32> -> vector<16x32xf32>
    %cst_46 = arith.constant 1.06140542 : f32
    %104 = vector.broadcast %cst_46 : f32 to vector<16x32xf32>
    %105 = arith.mulf %103, %104 : vector<16x32xf32>
    %cst_47 = arith.constant -1.45315206 : f32
    %106 = vector.broadcast %cst_47 : f32 to vector<16x32xf32>
    %107 = arith.addf %106, %105 : vector<16x32xf32>
    %108 = arith.mulf %103, %107 : vector<16x32xf32>
    %cst_48 = arith.constant 1.42141378 : f32
    %109 = vector.broadcast %cst_48 : f32 to vector<16x32xf32>
    %110 = arith.addf %109, %108 : vector<16x32xf32>
    %111 = arith.mulf %103, %110 : vector<16x32xf32>
    %cst_49 = arith.constant -0.284496725 : f32
    %112 = vector.broadcast %cst_49 : f32 to vector<16x32xf32>
    %113 = arith.addf %112, %111 : vector<16x32xf32>
    %114 = arith.mulf %103, %113 : vector<16x32xf32>
    %cst_50 = arith.constant 0.254829586 : f32
    %115 = vector.broadcast %cst_50 : f32 to vector<16x32xf32>
    %116 = arith.addf %115, %114 : vector<16x32xf32>
    %117 = arith.mulf %103, %116 : vector<16x32xf32>
    %cst_51 = arith.constant 0.000000e+00 : f32
    %118 = vector.broadcast %cst_51 : f32 to vector<16x32xf32>
    %119 = arith.subf %118, %98 : vector<16x32xf32>
    %120 = arith.mulf %119, %98 : vector<16x32xf32>
    %121 = math.exp %120 : vector<16x32xf32>
    %122 = arith.mulf %117, %121 : vector<16x32xf32>
    %cst_52 = arith.constant 1.000000e+00 : f32
    %123 = vector.broadcast %cst_52 : f32 to vector<16x32xf32>
    %124 = arith.subf %123, %122 : vector<16x32xf32>
    %cst_53 = arith.constant 0.000000e+00 : f32
    %125 = vector.broadcast %cst_53 : f32 to vector<16x32xf32>
    %126 = arith.cmpf oge, %95, %125 : vector<16x32xf32>
    %cst_54 = arith.constant 0.000000e+00 : f32
    %127 = vector.broadcast %cst_54 : f32 to vector<16x32xf32>
    %128 = arith.subf %127, %124 : vector<16x32xf32>
    %129 = arith.select %126, %124, %128 : vector<16x32xi1>, vector<16x32xf32>
    %cst_55 = arith.constant 5.000000e-01 : f32
    %130 = vector.broadcast %cst_55 : f32 to vector<16x32xf32>
    %131 = arith.mulf %130, %95 : vector<16x32xf32>
    %cst_56 = arith.constant 1.000000e+00 : f32
    %132 = vector.broadcast %cst_56 : f32 to vector<16x32xf32>
    %133 = arith.addf %132, %129 : vector<16x32xf32>
    %134 = arith.mulf %131, %133 : vector<16x32xf32>
    %135 = vector.shape_cast %134 : vector<16x32xf32> to vector<2x8x32xf32>
    %cst_57 = arith.constant dense<0xFF800000> : vector<2x32xf32>
    %136 = vector.multi_reduction <maximumf>, %135, %cst_57 [1] : vector<2x8x32xf32> to vector<2x32xf32>
    %c0_58 = arith.constant 0 : index
    %c0_59 = arith.constant 0 : index
    %137 = vector.load %arg8[%c0_58, %c0_59] : memref<32x2xbf16, #tpu.memory_space<vmem>>, vector<32x2xbf16>
    %138 = arith.extf %137 : vector<32x2xbf16> to vector<32x2xf32>
    %cst_60 = arith.constant dense<0.000000e+00> : vector<2x2xf32>
    %139 = tpu.matmul %136, %138, %cst_60 {dimension_numbers = #tpu.dot_dimension_numbers<[1], [0], [0], [1], [0, 0, 1, 1], [], []>} : vector<2x32xf32>, vector<32x2xf32>, vector<2x2xf32> -> vector<2x2xf32>
    %c0_61 = arith.constant 0 : index
    %c0_62 = arith.constant 0 : index
    %140 = vector.load %arg9[%c0_61, %c0_62] : memref<1x2xf32, #tpu.memory_space<vmem>>, vector<1x2xf32>
    %141 = vector.broadcast %140 : vector<1x2xf32> to vector<2x2xf32>
    %142 = arith.addf %139, %141 : vector<2x2xf32>
    %c0_63 = arith.constant 0 : index
    %c0_64 = arith.constant 0 : index
    %143 = vector.load %arg11[%c0_63, %c0_64] : memref<2x32xf32, #tpu.memory_space<vmem>>, vector<2x32xf32>
    tpu.vector_store %arg11[%c0_63, %c0_64], %136 {strides = array<i32>} : memref<2x32xf32, #tpu.memory_space<vmem>>, vector<2x32xf32>,
    %c0_65 = arith.constant 0 : index
    %c0_66 = arith.constant 0 : index
    %144 = vector.load %arg10[%c0_65, %c0_66] : memref<2x2xf32, #tpu.memory_space<vmem>>, vector<2x2xf32>
    tpu.vector_store %arg10[%c0_65, %c0_66], %142 {strides = array<i32>} : memref<2x2xf32, #tpu.memory_space<vmem>>, vector<2x2xf32>,
    return
  }
  func.func @transform_0(%arg0: i32) -> (i32, i32) {
    %c0_i32 = arith.constant 0 : i32
    %c0_i32_0 = arith.constant 0 : i32
    return %arg0, %c0_i32 : i32, i32
  }
  func.func @transform_1(%arg0: i32) -> (i32, i32) {
    %c0_i32 = arith.constant 0 : i32
    %c0_i32_0 = arith.constant 0 : i32
    %c0_i32_1 = arith.constant 0 : i32
    return %c0_i32, %c0_i32_0 : i32, i32
  }
  func.func @transform_2(%arg0: i32) -> (i32, i32) {
    %c0_i32 = arith.constant 0 : i32
    %c0_i32_0 = arith.constant 0 : i32
    %c0_i32_1 = arith.constant 0 : i32
    return %c0_i32, %c0_i32_0 : i32, i32
  }
  func.func @transform_3(%arg0: i32) -> (i32, i32) {
    %c0_i32 = arith.constant 0 : i32
    %c0_i32_0 = arith.constant 0 : i32
    %c0_i32_1 = arith.constant 0 : i32
    return %c0_i32, %c0_i32_0 : i32, i32
  }
  func.func @transform_4(%arg0: i32) -> (i32, i32) {
    %c0_i32 = arith.constant 0 : i32
    %c0_i32_0 = arith.constant 0 : i32
    %c0_i32_1 = arith.constant 0 : i32
    return %c0_i32, %c0_i32_0 : i32, i32
  }
  func.func @transform_5(%arg0: i32) -> (i32, i32) {
    %c0_i32 = arith.constant 0 : i32
    %c0_i32_0 = arith.constant 0 : i32
    %c0_i32_1 = arith.constant 0 : i32
    return %c0_i32, %c0_i32_0 : i32, i32
  }
  func.func @transform_6(%arg0: i32) -> (i32, i32) {
    %c0_i32 = arith.constant 0 : i32
    %c0_i32_0 = arith.constant 0 : i32
    %c0_i32_1 = arith.constant 0 : i32
    return %c0_i32, %c0_i32_0 : i32, i32
  }
  func.func @transform_7(%arg0: i32) -> (i32, i32) {
    %c0_i32 = arith.constant 0 : i32
    %c0_i32_0 = arith.constant 0 : i32
    %c0_i32_1 = arith.constant 0 : i32
    return %c0_i32, %c0_i32_0 : i32, i32
  }
  func.func @transform_8(%arg0: i32) -> (i32, i32) {
    %c0_i32 = arith.constant 0 : i32
    %c0_i32_0 = arith.constant 0 : i32
    %c0_i32_1 = arith.constant 0 : i32
    return %c0_i32, %c0_i32_0 : i32, i32
  }
  func.func @transform_9(%arg0: i32) -> (i32, i32) {
    %c0_i32 = arith.constant 0 : i32
    %c0_i32_0 = arith.constant 0 : i32
    return %arg0, %c0_i32 : i32, i32
  }
  func.func @transform_10(%arg0: i32) -> (i32, i32) {
    %c0_i32 = arith.constant 0 : i32
    %c0_i32_0 = arith.constant 0 : i32
    return %arg0, %c0_i32 : i32, i32
  }
}

</mosaic_0001>

<llo_original>
// kernel: tpu_custom_call.1
$region0: #{tpu_custom_call.1}
  #allocation0 [shape = 'u32[]', space=smem, size = 0x4, offset = 0x4, fixed_abs, tag = 'smem constant byte address 0x4 - core index']
  #allocation1 [shape = 'u32[72,128]{1,0:T(1,128)}', space=vmem, size = 0x9000, scoped, tag = 'internal scratch']
  %s0 = inlined_call_operand.hbm [shape: bf16[16,32], index: 0, kind: input, shape index: {}]
  %s1 = inlined_call_operand.vmem [shape: bf16[32,64], index: 1, kind: input, shape index: {}]
  %s2 = inlined_call_operand.vmem [shape: f32[1,64], index: 2, kind: input, shape index: {}]
  %s3 = inlined_call_operand.vmem [shape: bf16[64,64], index: 3, kind: input, shape index: {}]
  %s4 = inlined_call_operand.vmem [shape: f32[1,64], index: 4, kind: input, shape index: {}]
  %s5 = inlined_call_operand.vmem [shape: bf16[64,32], index: 5, kind: input, shape index: {}]
  %s6 = inlined_call_operand.vmem [shape: f32[1,32], index: 6, kind: input, shape index: {}]
  %s7 = inlined_call_operand.vmem [shape: bf16[32,2], index: 7, kind: input, shape index: {}]
  %s8 = inlined_call_operand.vmem [shape: f32[1,2], index: 8, kind: input, shape index: {}]
  %s9 = inlined_call_operand.hbm [shape: f32[2,2], index: 9, kind: output, shape index: {0}]
  %s10 = inlined_call_operand.hbm [shape: f32[2,32], index: 10, kind: output, shape index: {1}]
  %11 = xla_tuple %s9, %s10
  %s12 = sld [smem:[#allocation0]]
  $region58: #{tpu_custom_call.1} parent=0
    _
  %s14 = ssub.s32 1, %s12
  %s15 = scalar_select 0, %s14, %s12
  $region1: #{tpu_custom_call.1} parent=0
    #allocation2 [shape = 'u8[4096]{0}', space=vmem, size = 0x1000, scoped, tag = 'input window, operand 0, single buffered']
    #allocation3 [shape = 's32[1]{0}', space=sflag, size = 0x4, scoped, tag = 'scoped memory for tpu_custom_call.1']
    #allocation4 [shape = 's32[1]{0}', space=sflag, size = 0x4, scoped, tag = 'scoped memory for tpu_custom_call.1']
    #allocation5 [shape = 'u8[1024]{0}', space=vmem, size = 0x400, scoped, tag = 'output window, operand 0, single buffered']
    #allocation6 [shape = 'u8[1024]{0}', space=vmem, size = 0x400, scoped, tag = 'output window, operand 1, single buffered']
    #allocation7 [shape = 's32[1]{0}', space=sflag, size = 0x4, scoped, tag = 'scoped memory for tpu_custom_call.1']
    %16 = vsyncpa [#allocation3], 0
    %17 = vsyncpa [#allocation4], 0
    %18 = vsyncpa [#allocation7], 0
    // Predicated region
    $region2: #{tpu_custom_call.1} parent=1 // pred_check
      _
    $region3: #{tpu_custom_call.1} parent=1 // pred_check_branch
      %20 = sbr.rel (0) target = $region5
    $region4: #{tpu_custom_call.1} parent=1 // pred_region
      %22 = vsyncadd [#allocation3], 0
      %s23 = sshll.u32 %s0, 4
      %s24 = int_to_ptr.hbm [resolvable:$true] %s23
      %s25 = sshll.u32 [#allocation2], 4
      %s26 = int_to_ptr.vmem [resolvable:$true] %s25
      %31 = dma.hbm_to_vmem [thread:$0]  %s24, 128, %s26, [#allocation3], 64, 64, 4
    $region5: #{tpu_custom_call.1} parent=1 // pred_fallthru
      _
    // Predicated region
    $region6: #{tpu_custom_call.1} parent=1 // pred_check
      _
    $region7: #{tpu_custom_call.1} parent=1 // pred_check_branch
      %33 = sbr.rel (0) target = $region9
    $region8: #{tpu_custom_call.1} parent=1 // pred_region
      _
    $region9: #{tpu_custom_call.1} parent=1 // pred_fallthru
      _
    // Predicated region
    $region10: #{tpu_custom_call.1} parent=1 // pred_check
      _
    $region11: #{tpu_custom_call.1} parent=1 // pred_check_branch
      %35 = sbr.rel (0) target = $region13
    $region12: #{tpu_custom_call.1} parent=1 // pred_region
      _
    $region13: #{tpu_custom_call.1} parent=1 // pred_fallthru
      _
    // Predicated region
    $region14: #{tpu_custom_call.1} parent=1 // pred_check
      _
    $region15: #{tpu_custom_call.1} parent=1 // pred_check_branch
      %37 = sbr.rel (0) target = $region17
    $region16: #{tpu_custom_call.1} parent=1 // pred_region
      _
    $region17: #{tpu_custom_call.1} parent=1 // pred_fallthru
      _
    // Predicated region
    $region18: #{tpu_custom_call.1} parent=1 // pred_check
      _
    $region19: #{tpu_custom_call.1} parent=1 // pred_check_branch
      %39 = sbr.rel (0) target = $region21
    $region20: #{tpu_custom_call.1} parent=1 // pred_region
      _
    $region21: #{tpu_custom_call.1} parent=1 // pred_fallthru
      _
    // Predicated region
    $region22: #{tpu_custom_call.1} parent=1 // pred_check
      _
    $region23: #{tpu_custom_call.1} parent=1 // pred_check_branch
      %41 = sbr.rel (0) target = $region25
    $region24: #{tpu_custom_call.1} parent=1 // pred_region
      _
    $region25: #{tpu_custom_call.1} parent=1 // pred_fallthru
      _
    // Predicated region
    $region26: #{tpu_custom_call.1} parent=1 // pred_check
      _
    $region27: #{tpu_custom_call.1} parent=1 // pred_check_branch
      %43 = sbr.rel (0) target = $region29
    $region28: #{tpu_custom_call.1} parent=1 // pred_region
      _
    $region29: #{tpu_custom_call.1} parent=1 // pred_fallthru
      _
    // Predicated region
    $region30: #{tpu_custom_call.1} parent=1 // pred_check
      _
    $region31: #{tpu_custom_call.1} parent=1 // pred_check_branch
      %45 = sbr.rel (0) target = $region33
    $region32: #{tpu_custom_call.1} parent=1 // pred_region
      _
    $region33: #{tpu_custom_call.1} parent=1 // pred_fallthru
      _
    // Predicated region
    $region34: #{tpu_custom_call.1} parent=1 // pred_check
      _
    $region35: #{tpu_custom_call.1} parent=1 // pred_check_branch
      %47 = sbr.rel (0) target = $region37
    $region36: #{tpu_custom_call.1} parent=1 // pred_region
      _
    $region37: #{tpu_custom_call.1} parent=1 // pred_fallthru
      _
    // Predicated region
    $region38: #{tpu_custom_call.1} parent=1 // pred_check
      _
    $region39: #{tpu_custom_call.1} parent=1 // pred_check_branch
      %49 = sbr.rel (0) target = $region41
    $region40: #{tpu_custom_call.1} parent=1 // pred_region
      %51 = dma.done [#allocation3], 128
    $region41: #{tpu_custom_call.1} parent=1 // pred_fallthru
      _
    %v53 = vld [vmem:[#allocation2] sm:$0xf]
    %v54 = vld [vmem:[#allocation2 + $0x4] sm:$0xf]
    %v55 = vld [vmem:[%s1] sm:$0xf]
    %v56 = vld [vmem:[%s1 + $0x4] sm:$0xf]
    %v57 = vld [vmem:[%s1 + $0x8] sm:$0xf]
    %v58 = vld [vmem:[%s1 + $0xc] sm:$0xf]
    %v59 = vld [vmem:[%s2] sm:$0x1]
    %v61 = vperm.slane %v59, 0
    %v65 = vunpack.c.l.b16 %v53
    %v66 = vunpack.c.l.b16 %v54
    %v67 = vpack.c.b16 %v66, %v65
    %v72 = vunpack.c.l.b16 %v55
    %v73 = vunpack.c.l.b16 %v56
    %v74 = vunpack.c.l.b16 %v57
    %v75 = vunpack.c.l.b16 %v58
    %v76 = vpack.c.b16 %v73, %v72
    %v77 = vpack.c.b16 %v75, %v74
    %vm80 = vcmask 261120
    %v82 = vsel %vm80, %v67, 0
    %84 = vmatpush.bf16.msra.mxu0 0
    %85 = vmatpush.bf16.msra.mxu0 0
    %86 = vmatpush.bf16.msra.mxu0 0
    %87 = vmatpush.bf16.msra.mxu0 0
    %88 = vmatpush.bf16.msra.mxu0 0
    %89 = vmatpush.bf16.msra.mxu0 0
    %90 = vmatpush.bf16.msra.mxu0 %v77
    %91 = vmatpush.bf16.msra.mxu0 %v76
    %92 = vmatmul.bf16.gmra.mxu0 %v82
    %v93 = vpop.f32.mrf.mxu0
    %v94 = vadd.f32 %v61, %v93
    %v95 = vpop.f32.mrf.mxu0
    %v96 = vadd.f32 %v61, %v95
    %97 = vdwg.mxu0
    %v98 = vmul.f32 %v94, 0.70710677
    %v99 = vmul.f32 %v96, 0.70710677
    %v100 = vand.u32 2147483647, %v98
    %v101 = vand.u32 2147483647, %v99
    %v102 = vmul.f32 %v100, 0.3275911
    %v103 = vmul.f32 %v101, 0.3275911
    %v104 = vadd.f32 %v102, 1.0
    %v105 = vadd.f32 %v103, 1.0
    %v106 = vrcp.pop %v104
    %v107 = vrcp.pop %v105
    %v108 = vmul.f32 %v106, 1.0614054
    %v109 = vmul.f32 %v107, 1.0614054
    %v110 = vadd.f32 %v108, -1.4531521
    %v111 = vadd.f32 %v109, -1.4531521
    %v112 = vmul.f32 %v106, %v110
    %v113 = vmul.f32 %v107, %v111
    %v114 = vadd.f32 %v112, 1.4214138
    %v115 = vadd.f32 %v113, 1.4214138
    %v116 = vmul.f32 %v106, %v114
    %v117 = vmul.f32 %v107, %v115
    %v118 = vadd.f32 %v116, -0.28449672
    %v119 = vadd.f32 %v117, -0.28449672
    %v120 = vmul.f32 %v106, %v118
    %v121 = vmul.f32 %v107, %v119
    %v122 = vadd.f32 %v120, 0.2548296
    %v123 = vadd.f32 %v121, 0.2548296
    %v124 = vmul.f32 %v106, %v122
    %v125 = vmul.f32 %v107, %v123
    %v126 = vsub.f32 0.0, %v100
    %v127 = vsub.f32 0.0, %v101
    %v128 = vmul.f32 %v126, %v100
    %v129 = vmul.f32 %v127, %v101
    %v130 = vmul.f32 %v128, 1.442695
    %v131 = vpow.pop %v130
    %v132 = vmul.f32 %v129, 1.442695
    %v133 = vpow.pop %v132
    %v134 = vmul.f32 %v124, %v131
    %v135 = vmul.f32 %v125, %v133
    %v136 = vsub.f32 1.0, %v134
    %v137 = vsub.f32 1.0, %v135
    %vm138 = vcmp.ge.f32.partialorder %v94, 0.0
    %vm139 = vcmp.ge.f32.partialorder %v96, 0.0
    %v140 = vsub.f32 0.0, %v136
    %v141 = vsub.f32 0.0, %v137
    %v142 = vsel %vm138, %v136, %v140
    %v143 = vsel %vm139, %v137, %v141
    %v144 = vmul.f32 %v94, 0.5
    %v145 = vmul.f32 %v96, 0.5
    %v146 = vadd.f32 %v142, 1.0
    %v147 = vadd.f32 %v143, 1.0
    %v148 = vmul.f32 %v144, %v146
    %v149 = vmul.f32 %v145, %v147
    %v150 = vpack.c.bf16 %v149, %v148
    %v151 = vld [vmem:[%s3] sm:$0xf]
    %v152 = vld [vmem:[%s3 + $0x4] sm:$0xf]
    %v153 = vld [vmem:[%s3 + $0x8] sm:$0xf]
    %v154 = vld [vmem:[%s3 + $0xc] sm:$0xf]
    %v155 = vld [vmem:[%s3 + $0x10] sm:$0xf]
    %v156 = vld [vmem:[%s3 + $0x14] sm:$0xf]
    %v157 = vld [vmem:[%s3 + $0x18] sm:$0xf]
    %v158 = vld [vmem:[%s3 + $0x1c] sm:$0xf]
    %v159 = vld [vmem:[%s4] sm:$0x1]
    %v161 = vperm.slane %v159, 0
    %v171 = vunpack.c.l.b16 %v151
    %v172 = vunpack.c.l.b16 %v152
    %v173 = vunpack.c.l.b16 %v153
    %v174 = vunpack.c.l.b16 %v154
    %v175 = vunpack.c.l.b16 %v155
    %v176 = vunpack.c.l.b16 %v156
    %v177 = vunpack.c.l.b16 %v157
    %v178 = vunpack.c.l.b16 %v158
    %v179 = vpack.c.b16 %v172, %v171
    %v180 = vpack.c.b16 %v174, %v173
    %v181 = vpack.c.b16 %v176, %v175
    %v182 = vpack.c.b16 %v178, %v177
    %vm187 = vcmask 523264
    %v189 = vsel %vm187, %v150, 0
    %191 = vmatpush.bf16.msra.mxu0 0
    %192 = vmatpush.bf16.msra.mxu0 0
    %193 = vmatpush.bf16.msra.mxu0 0
    %194 = vmatpush.bf16.msra.mxu0 0
    %195 = vmatpush.bf16.msra.mxu0 %v182
    %196 = vmatpush.bf16.msra.mxu0 %v181
    %197 = vmatpush.bf16.msra.mxu0 %v180
    %198 = vmatpush.bf16.msra.mxu0 %v179
    %199 = vmatmul.bf16.gmra.mxu0 %v189
    %v200 = vpop.f32.mrf.mxu0
    %v201 = vadd.f32 %v161, %v200
    %v202 = vpop.f32.mrf.mxu0
    %v203 = vadd.f32 %v161, %v202
    %204 = vdwg.mxu0
    %v205 = vmul.f32 %v201, 0.70710677
    %v206 = vmul.f32 %v203, 0.70710677
    %v207 = vand.u32 2147483647, %v205
    %v208 = vand.u32 2147483647, %v206
    %v209 = vmul.f32 %v207, 0.3275911
    %v210 = vmul.f32 %v208, 0.3275911
    %v211 = vadd.f32 %v209, 1.0
    %v212 = vadd.f32 %v210, 1.0
    %v213 = vrcp.pop %v211
    %v214 = vrcp.pop %v212
    %v215 = vmul.f32 %v213, 1.0614054
    %v216 = vmul.f32 %v214, 1.0614054
    %v217 = vadd.f32 %v215, -1.4531521
    %v218 = vadd.f32 %v216, -1.4531521
    %v219 = vmul.f32 %v213, %v217
    %v220 = vmul.f32 %v214, %v218
    %v221 = vadd.f32 %v219, 1.4214138
    %v222 = vadd.f32 %v220, 1.4214138
    %v223 = vmul.f32 %v213, %v221
    %v224 = vmul.f32 %v214, %v222
    %v225 = vadd.f32 %v223, -0.28449672
    %v226 = vadd.f32 %v224, -0.28449672
    %v227 = vmul.f32 %v213, %v225
    %v228 = vmul.f32 %v214, %v226
    %v229 = vadd.f32 %v227, 0.2548296
    %v230 = vadd.f32 %v228, 0.2548296
    %v231 = vmul.f32 %v213, %v229
    %v232 = vmul.f32 %v214, %v230
    %v233 = vsub.f32 0.0, %v207
    %v234 = vsub.f32 0.0, %v208
    %v235 = vmul.f32 %v233, %v207
    %v236 = vmul.f32 %v234, %v208
    %v237 = vmul.f32 %v235, 1.442695
    %v238 = vpow.pop %v237
    %v239 = vmul.f32 %v236, 1.442695
    %v240 = vpow.pop %v239
    %v241 = vmul.f32 %v231, %v238
    %v242 = vmul.f32 %v232, %v240
    %v243 = vsub.f32 1.0, %v241
    %v244 = vsub.f32 1.0, %v242
    %vm245 = vcmp.ge.f32.partialorder %v201, 0.0
    %vm246 = vcmp.ge.f32.partialorder %v203, 0.0
    %v247 = vsub.f32 0.0, %v243
    %v248 = vsub.f32 0.0, %v244
    %v249 = vsel %vm245, %v243, %v247
    %v250 = vsel %vm246, %v244, %v248
    %v251 = vmul.f32 %v201, 0.5
    %v252 = vmul.f32 %v203, 0.5
    %v253 = vadd.f32 %v249, 1.0
    %v254 = vadd.f32 %v250, 1.0
    %v255 = vmul.f32 %v251, %v253
    %v256 = vmul.f32 %v252, %v254
    %v257 = vpack.c.bf16 %v256, %v255
    %v258 = vld [vmem:[%s5] sm:$0xf]
    %v259 = vld [vmem:[%s5 + $0x4] sm:$0xf]
    %v260 = vld [vmem:[%s5 + $0x8] sm:$0xf]
    %v261 = vld [vmem:[%s5 + $0xc] sm:$0xf]
    %v262 = vld [vmem:[%s5 + $0x10] sm:$0xf]
    %v263 = vld [vmem:[%s5 + $0x14] sm:$0xf]
    %v264 = vld [vmem:[%s5 + $0x18] sm:$0xf]
    %v265 = vld [vmem:[%s5 + $0x1c] sm:$0xf]
    %v266 = vld [vmem:[%s6] sm:$0x1]
    %v268 = vperm.slane %v266, 0
    %v278 = vunpack.c.l.b16 %v258
    %v279 = vunpack.c.l.b16 %v259
    %v280 = vunpack.c.l.b16 %v260
    %v281 = vunpack.c.l.b16 %v261
    %v282 = vunpack.c.l.b16 %v262
    %v283 = vunpack.c.l.b16 %v263
    %v284 = vunpack.c.l.b16 %v264
    %v285 = vunpack.c.l.b16 %v265
    %v286 = vpack.c.b16 %v279, %v278
    %v287 = vpack.c.b16 %v281, %v280
    %v288 = vpack.c.b16 %v283, %v282
    %v289 = vpack.c.b16 %v285, %v284
    %v295 = vsel %vm187, %v257, 0
    %297 = vmatpush.bf16.msra.mxu0 0
    %298 = vmatpush.bf16.msra.mxu0 0
    %299 = vmatpush.bf16.msra.mxu0 0
    %300 = vmatpush.bf16.msra.mxu0 0
    %301 = vmatpush.bf16.msra.mxu0 %v289
    %302 = vmatpush.bf16.msra.mxu0 %v288
    %303 = vmatpush.bf16.msra.mxu0 %v287
    %304 = vmatpush.bf16.msra.mxu0 %v286
    %305 = vmatmul.bf16.gmra.mxu0 %v295
    %v306 = vpop.f32.mrf.mxu0
    %v307 = vadd.f32 %v268, %v306
    %v308 = vpop.f32.mrf.mxu0
    %v309 = vadd.f32 %v268, %v308
    %310 = vdwg.mxu0
    %v311 = vmul.f32 %v307, 0.70710677
    %v312 = vmul.f32 %v309, 0.70710677
    %v313 = vand.u32 2147483647, %v311
    %v314 = vand.u32 2147483647, %v312
    %v315 = vmul.f32 %v313, 0.3275911
    %v316 = vmul.f32 %v314, 0.3275911
    %v317 = vadd.f32 %v315, 1.0
    %v318 = vadd.f32 %v316, 1.0
    %v319 = vrcp.pop %v317
    %v320 = vrcp.pop %v318
    %v321 = vmul.f32 %v319, 1.0614054
    %v322 = vmul.f32 %v320, 1.0614054
    %v323 = vadd.f32 %v321, -1.4531521
    %v324 = vadd.f32 %v322, -1.4531521
    %v325 = vmul.f32 %v319, %v323
    %v326 = vmul.f32 %v320, %v324
    %v327 = vadd.f32 %v325, 1.4214138
    %v328 = vadd.f32 %v326, 1.4214138
    %v329 = vmul.f32 %v319, %v327
    %v330 = vmul.f32 %v320, %v328
    %v331 = vadd.f32 %v329, -0.28449672
    %v332 = vadd.f32 %v330, -0.28449672
    %v333 = vmul.f32 %v319, %v331
    %v334 = vmul.f32 %v320, %v332
    %v335 = vadd.f32 %v333, 0.2548296
    %v336 = vadd.f32 %v334, 0.2548296
    %v337 = vmul.f32 %v319, %v335
    %v338 = vmul.f32 %v320, %v336
    %v339 = vsub.f32 0.0, %v313
    %v340 = vsub.f32 0.0, %v314
    %v341 = vmul.f32 %v339, %v313
    %v342 = vmul.f32 %v340, %v314
    %v343 = vmul.f32 %v341, 1.442695
    %v344 = vpow.pop %v343
    %v345 = vmul.f32 %v342, 1.442695
    %v346 = vpow.pop %v345
    %v347 = vmul.f32 %v337, %v344
    %v348 = vmul.f32 %v338, %v346
    %v349 = vsub.f32 1.0, %v347
    %v350 = vsub.f32 1.0, %v348
    %vm351 = vcmp.ge.f32.partialorder %v307, 0.0
    %vm352 = vcmp.ge.f32.partialorder %v309, 0.0
    %v353 = vsub.f32 0.0, %v349
    %v354 = vsub.f32 0.0, %v350
    %v355 = vsel %vm351, %v349, %v353
    %v356 = vsel %vm352, %v350, %v354
    %v357 = vmul.f32 %v307, 0.5
    %v358 = vmul.f32 %v309, 0.5
    %v359 = vadd.f32 %v355, 1.0
    %v360 = vadd.f32 %v356, 1.0
    %v361 = vmul.f32 %v357, %v359
    %v362 = vmul.f32 %v358, %v360
    %v363 = vsel %vm80, %v361, -inf
    %v364 = vrot.slane %v363, 4
    %v365 = vmax.f32 %v363, %v364
    %v366 = vrot.slane %v365, 2
    %v367 = vmax.f32 %v365, %v366
    %v368 = vrot.slane %v367, 1
    %v369 = vmax.f32 %v367, %v368
    %v370 = vsel %vm80, %v362, -inf
    %v371 = vrot.slane %v370, 4
    %v372 = vmax.f32 %v370, %v371
    %v373 = vrot.slane %v372, 2
    %v374 = vmax.f32 %v372, %v373
    %v375 = vrot.slane %v374, 1
    %v376 = vmax.f32 %v374, %v375
    %v377 = vld [vmem:[%s7] sm:$0xf]
    %v378 = vld [vmem:[%s7 + $0x4] sm:$0xf]
    %v379 = vld [vmem:[%s7 + $0x8] sm:$0xf]
    %v380 = vld [vmem:[%s7 + $0xc] sm:$0xf]
    %v381 = vunpack.c.l.bf16 %v377
    %v382 = vunpack.c.l.bf16 %v378
    %v383 = vunpack.c.l.bf16 %v379
    %v384 = vunpack.c.l.bf16 %v380
    %v385 = vld [vmem:[%s8] sm:$0x1]
    %v387 = vperm.slane %v385, 0
    %vm391 = vcmask 1041409
    %v392 = vsel %vm391, %v376, %v369
    %v393 = vsel %vm80, %v392, 0
    %395 = vmatpush.msra.mxu0 0.0
    %396 = vmatpush.msra.mxu0 0.0
    %397 = vmatpush.msra.mxu0 0.0
    %398 = vmatpush.msra.mxu0 0.0
    %399 = vmatpush.msra.mxu0 0.0
    %400 = vmatpush.msra.mxu0 0.0
    %401 = vmatpush.msra.mxu0 0.0
    %402 = vmatpush.msra.mxu0 0.0
    %403 = vmatpush.msra.mxu0 0.0
    %404 = vmatpush.msra.mxu0 0.0
    %405 = vmatpush.msra.mxu0 0.0
    %406 = vmatpush.msra.mxu0 0.0
    %407 = vmatpush.msra.mxu0 %v384
    %408 = vmatpush.msra.mxu0 %v383
    %409 = vmatpush.msra.mxu0 %v382
    %410 = vmatpush.msra.mxu0 %v381
    %411 = vmatmul.f32.gmra.mxu0 %v393
    %v412 = vpop.f32.mrf.mxu0
    %v413 = vadd.f32 %v387, %v412
    %414 = vdwg.mxu0
    %vm416 = vcmask 254976
    %417 = vst.msk [vmem:[#allocation6] sm:$0x3] %vm416, %v392
    %vm418 = vcmask 9216
    %419 = vst.msk [vmem:[#allocation5] sm:$0x3] %vm418, %v413
    // Predicated region
    $region42: #{tpu_custom_call.1} parent=1 // pred_check
      _
    $region43: #{tpu_custom_call.1} parent=1 // pred_check_branch
      %421 = sbr.rel (0) target = $region45
    $region44: #{tpu_custom_call.1} parent=1 // pred_region
      %423 = vsyncadd [#allocation4], 0
      %s425 = sshll.u32 [#allocation5], 4
      %s426 = int_to_ptr.vmem [resolvable:$true] %s425
      %s427 = sshll.u32 %s9, 4
      %s428 = int_to_ptr.hbm [resolvable:$true] %s427
      %430 = dma.vmem_to_hbm [thread:$0]  %s426, 32, %s428, [#allocation4]
    $region45: #{tpu_custom_call.1} parent=1 // pred_fallthru
      _
    // Predicated region
    $region46: #{tpu_custom_call.1} parent=1 // pred_check
      _
    $region47: #{tpu_custom_call.1} parent=1 // pred_check_branch
      %432 = sbr.rel (0) target = $region49
    $region48: #{tpu_custom_call.1} parent=1 // pred_region
      %434 = vsyncadd [#allocation7], 0
      %s436 = sshll.u32 [#allocation6], 4
      %s437 = int_to_ptr.vmem [resolvable:$true] %s436
      %s438 = sshll.u32 %s10, 4
      %s439 = int_to_ptr.hbm [resolvable:$true] %s438
      %441 = dma.vmem_to_hbm [thread:$0]  %s437, 32, %s439, [#allocation7]
    $region49: #{tpu_custom_call.1} parent=1 // pred_fallthru
      _
    // Predicated region
    $region50: #{tpu_custom_call.1} parent=1 // pred_check
      _
    $region51: #{tpu_custom_call.1} parent=1 // pred_check_branch
      %443 = sbr.rel (0) target = $region53
    $region52: #{tpu_custom_call.1} parent=1 // pred_region
      %445 = dma.done [#allocation4], 32
    $region53: #{tpu_custom_call.1} parent=1 // pred_fallthru
      _
    // Predicated region
    $region54: #{tpu_custom_call.1} parent=1 // pred_check
      _
    $region55: #{tpu_custom_call.1} parent=1 // pred_check_branch
      %447 = sbr.rel (0) target = $region57
    $region56: #{tpu_custom_call.1} parent=1 // pred_region
      %449 = dma.done [#allocation7], 32
    $region57: #{tpu_custom_call.1} parent=1 // pred_fallthru
      _
    %450 = vsyncpa [#allocation3], 1
    %451 = vsyncpa [#allocation4], 1
    %452 = vsyncpa [#allocation7], 1

</llo_original>
